<compile_context>
chip_gen: v7x
topology: tpu7x:2x2x1
jax: 0.10.0
libtpu: 0.0.40
codegen_flags: <defaults>
</compile_context>

<pallas_src>
import functools

import jax
import jax.numpy as jnp
from jax import lax
from jax.experimental import pallas as pl
from jax.experimental.pallas import tpu as pltpu

# ----------------------------- model dimensions -----------------------------
B = 2                 # batch
S = 8                 # sequence length
H = 768               # hidden size  (matches self.out = 768 in CustomModel)
NUM_HEADS = 12
HEAD_DIM = H // NUM_HEADS
FFN = 3072
NUM_LAYERS = 2        # small stand-in depth for the pretrained encoder
VOCAB = 128
NUM_CLASSES = 33      # nn.Linear(in_features=768, out_features=33)
CLS_PAD = 128         # classifier output padded to a lane-dense width
EPS = 1e-12

_MOSAIC_PARAMS = pltpu.CompilerParams(
    dimension_semantics=("parallel",),
    vmem_limit_bytes=32 * 1024 * 1024,
)


# ---------------- linear kernel: y = act(x @ W + b), tiled over N -----------
def _linear_kernel(x_ref, w_ref, b_ref, o_ref, *, activation):
    y = jnp.dot(x_ref[...].astype(jnp.bfloat16), w_ref[...],
                preferred_element_type=jnp.float32)
    y = y + b_ref[...]
    if activation == "gelu":
        # tanh-approximate GELU (EUP tanh)
        y = 0.5 * y * (1.0 + jnp.tanh(0.7978845608028654 * (y + 0.044715 * y * y * y)))
    o_ref[...] = y.astype(o_ref.dtype)


def pallas_linear(x, w, b, activation=None, tn=None):
    M, K = x.shape
    _, N = w.shape
    if tn is None:
        # 768-wide lane-dense tiles -> >=2 parallel blocks for v7x megacore; full N otherwise.
        tn = 768 if N % 768 == 0 else N
    grid = (N // tn,)
    return pl.pallas_call(
        functools.partial(_linear_kernel, activation=activation),
        out_shape=jax.ShapeDtypeStruct((M, N), jnp.float32),
        grid_spec=pltpu.PrefetchScalarGridSpec(
            num_scalar_prefetch=0,
            grid=grid,
            in_specs=[
                pl.BlockSpec((M, K), lambda j: (0, 0)),
                pl.BlockSpec((K, tn), lambda j: (0, j)),
                pl.BlockSpec((1, tn), lambda j: (0, j)),
            ],
            out_specs=pl.BlockSpec((M, tn), lambda j: (0, j)),
        ),
        compiler_params=_MOSAIC_PARAMS,
    )(x, w, b)


# ------- linear + residual + LayerNorm fused kernel, tiled over M rows ------
def _linear_res_ln_kernel(x_ref, w_ref, b_ref, r_ref, g_ref, beta_ref, o_ref, *, eps):
    y = jnp.dot(x_ref[...].astype(jnp.bfloat16), w_ref[...],
                preferred_element_type=jnp.float32)
    h = y + b_ref[...] + r_ref[...]
    mu = jnp.mean(h, axis=-1, keepdims=True)
    var = jnp.mean(jnp.square(h - mu), axis=-1, keepdims=True)
    inv = lax.rsqrt(var + eps)
    o_ref[...] = ((h - mu) * inv * g_ref[...] + beta_ref[...]).astype(o_ref.dtype)


def pallas_linear_res_ln(x, w, b, residual, gamma, beta):
    M, K = x.shape
    _, N = w.shape          # N == H (LayerNorm needs the full feature dim per step)
    tm = 8                  # 2 parallel row-blocks -> both v7x TensorCores busy
    return pl.pallas_call(
        functools.partial(_linear_res_ln_kernel, eps=EPS),
        out_shape=jax.ShapeDtypeStruct((M, N), jnp.float32),
        grid_spec=pltpu.PrefetchScalarGridSpec(
            num_scalar_prefetch=0,
            grid=(M // tm,),
            in_specs=[
                pl.BlockSpec((tm, K), lambda i: (i, 0)),
                pl.BlockSpec((K, N), lambda i: (0, 0)),
                pl.BlockSpec((1, N), lambda i: (0, 0)),
                pl.BlockSpec((tm, N), lambda i: (i, 0)),
                pl.BlockSpec((1, N), lambda i: (0, 0)),
                pl.BlockSpec((1, N), lambda i: (0, 0)),
            ],
            out_specs=pl.BlockSpec((tm, N), lambda i: (i, 0)),
        ),
        compiler_params=_MOSAIC_PARAMS,
    )(x, w, b, residual, gamma, beta)


# ---------------------- plain LayerNorm kernel (embeddings) -----------------
def _ln_kernel(x_ref, g_ref, b_ref, o_ref, *, eps):
    h = x_ref[...]
    mu = jnp.mean(h, axis=-1, keepdims=True)
    var = jnp.mean(jnp.square(h - mu), axis=-1, keepdims=True)
    inv = lax.rsqrt(var + eps)
    o_ref[...] = ((h - mu) * inv * g_ref[...] + b_ref[...]).astype(o_ref.dtype)


def pallas_layernorm(x, gamma, beta):
    M, D = x.shape
    tm = 8
    return pl.pallas_call(
        functools.partial(_ln_kernel, eps=EPS),
        out_shape=jax.ShapeDtypeStruct((M, D), jnp.float32),
        grid_spec=pltpu.PrefetchScalarGridSpec(
            num_scalar_prefetch=0,
            grid=(M // tm,),
            in_specs=[
                pl.BlockSpec((tm, D), lambda i: (i, 0)),
                pl.BlockSpec((1, D), lambda i: (0, 0)),
                pl.BlockSpec((1, D), lambda i: (0, 0)),
            ],
            out_specs=pl.BlockSpec((tm, D), lambda i: (i, 0)),
        ),
        compiler_params=_MOSAIC_PARAMS,
    )(x, gamma, beta)


# ------------- fused attention kernel: one batch row (all heads) per step ----
def _attention_kernel(qkv_ref, mask_ref, o_ref, *, num_heads, head_dim, hidden, scale):
    b = pl.program_id(0)
    mask_row = lax.dynamic_slice_in_dim(mask_ref[...], b, 1, axis=0)      # (1, S)
    bias = (mask_row - 1.0) * 1e9
    for h in range(num_heads):                                            # static unroll
        q = qkv_ref[:, h * head_dim:(h + 1) * head_dim]                   # (S, dh)
        k = qkv_ref[:, hidden + h * head_dim: hidden + (h + 1) * head_dim]
        v = qkv_ref[:, 2 * hidden + h * head_dim: 2 * hidden + (h + 1) * head_dim]
        scores = lax.dot_general(q, k, (((1,), (1,)), ((), ())),
                                 preferred_element_type=jnp.float32) * scale   # (S, S)
        scores = scores + bias
        m = jnp.max(scores, axis=-1, keepdims=True)
        p = jnp.exp(scores - m)
        probs = p / jnp.sum(p, axis=-1, keepdims=True)
        ctx = jnp.dot(probs, v, preferred_element_type=jnp.float32)       # (S, dh)
        # merged-heads layout written directly into the lane-dense (S, H) slab
        o_ref[:, h * head_dim:(h + 1) * head_dim] = ctx.astype(o_ref.dtype)


def pallas_attention(qkv, mask):
    M, _ = qkv.shape                          # (B*S, 3H)
    return pl.pallas_call(
        functools.partial(_attention_kernel, num_heads=NUM_HEADS,
                          head_dim=HEAD_DIM, hidden=H,
                          scale=1.0 / (HEAD_DIM ** 0.5)),
        out_shape=jax.ShapeDtypeStruct((M, H), jnp.float32),
        grid_spec=pltpu.PrefetchScalarGridSpec(
            num_scalar_prefetch=0,
            grid=(B,),
            in_specs=[
                pl.BlockSpec((S, 3 * H), lambda b: (b, 0)),
                pl.BlockSpec((B, S), lambda b: (0, 0)),
            ],
            out_specs=pl.BlockSpec((S, H), lambda b: (b, 0)),
        ),
        compiler_params=_MOSAIC_PARAMS,
    )(qkv, mask)


# ------------------------------ parameter init -------------------------------
def init_params(key):
    def norm(k, shape, scale=0.02):
        return scale * jax.random.normal(k, shape, dtype=jnp.float32)

    keys = jax.random.split(key, 4 + NUM_LAYERS)
    params = {
        "word_emb": norm(keys[0], (VOCAB, H)),
        "pos_emb": norm(keys[1], (S, H)),
        "type_emb": norm(keys[2], (2, H)),
        "emb_ln_g": jnp.ones((1, H), jnp.float32),
        "emb_ln_b": jnp.zeros((1, H), jnp.float32),
        "layers": [],
    }
    for li in range(NUM_LAYERS):
        lk = jax.random.split(keys[3 + li], 6)
        wq = norm(lk[0], (H, H))
        wk = norm(lk[1], (H, H))
        wv = norm(lk[2], (H, H))
        params["layers"].append({
            # fused QKV projection, bf16 weights (f32 accumulation in-kernel)
            "wqkv": jnp.concatenate([wq, wk, wv], axis=1).astype(jnp.bfloat16),
            "bqkv": jnp.zeros((1, 3 * H), jnp.float32),
            "wo": norm(lk[3], (H, H)).astype(jnp.bfloat16),
            "bo": jnp.zeros((1, H), jnp.float32),
            "w1": norm(lk[4], (H, FFN)).astype(jnp.bfloat16),
            "b1": jnp.zeros((1, FFN), jnp.float32),
            "w2": norm(lk[5], (FFN, H)).astype(jnp.bfloat16),
            "b2": jnp.zeros((1, H), jnp.float32),
            "ln1_g": jnp.ones((1, H), jnp.float32), "ln1_b": jnp.zeros((1, H), jnp.float32),
            "ln2_g": jnp.ones((1, H), jnp.float32), "ln2_b": jnp.zeros((1, H), jnp.float32),
        })
    ck = jax.random.split(keys[-1], 1)[0]
    cls_w = norm(ck, (H, NUM_CLASSES))
    # pad classifier to 128 output lanes (zeros) -> unmasked lane-dense stores
    params["cls_w"] = jnp.pad(cls_w, ((0, 0), (0, CLS_PAD - NUM_CLASSES))).astype(jnp.bfloat16)
    params["cls_b"] = jnp.zeros((1, CLS_PAD), jnp.float32)
    return params


# ------------------------------ forward pass ---------------------------------
def custom_model_forward(params, input_ids, attention_mask, token_type_ids=None):
    mask = attention_mask.astype(jnp.float32)                          # (B, S)
    if token_type_ids is None:
        token_type_ids = jnp.zeros_like(input_ids)

    # embeddings (gather is glue in plain JAX)
    emb = (params["word_emb"][input_ids]
           + params["pos_emb"][None, :, :]
           + params["type_emb"][token_type_ids])                       # (B, S, H)
    x = emb.reshape(B * S, H)
    x = pallas_layernorm(x, params["emb_ln_g"], params["emb_ln_b"])

    for layer in params["layers"]:
        qkv = pallas_linear(x, layer["wqkv"], layer["bqkv"])           # (B*S, 3H)
        ctx = pallas_attention(qkv, mask)                              # (B*S, H), merged heads
        x = pallas_linear_res_ln(ctx, layer["wo"], layer["bo"],
                                 x, layer["ln1_g"], layer["ln1_b"])    # attn out + res + LN
        h = pallas_linear(x, layer["w1"], layer["b1"], activation="gelu")
        x = pallas_linear_res_ln(h, layer["w2"], layer["b2"],
                                 x, layer["ln2_g"], layer["ln2_b"])    # FFN out + res + LN

    hidden = x.reshape(B, S, H)
    cls = hidden[:, 0, :]                                              # x[:, 0, :]
    # TODO(synk): nn.Dropout(p=0.2) is identity in inference mode (no-op here).
    logits_padded = pallas_linear(cls, params["cls_w"], params["cls_b"], tn=CLS_PAD)
    return logits_padded[:, :NUM_CLASSES]                              # (B, 33)


if __name__ == "__main__":
    key = jax.random.PRNGKey(0)
    pkey, dkey = jax.random.split(key)
    params = init_params(pkey)

    input_ids = jax.random.randint(dkey, (B, S), 0, VOCAB, dtype=jnp.int32)
    attention_mask = jnp.ones((B, S), dtype=jnp.int32)

    logits = custom_model_forward(params, input_ids, attention_mask)
    jax.block_until_ready(logits)
    assert logits.shape == (B, NUM_CLASSES)
    print("KERNEL_OK")
</pallas_src>

<mosaic_0001>
module attributes {stable_mosaic.version = 11 : i64} {
  func.func @_ln_kernel(%arg0: i32, %arg1: memref<8x768xf32, #tpu.memory_space<vmem>>, %arg2: memref<1x768xf32, #tpu.memory_space<vmem>>, %arg3: memref<1x768xf32, #tpu.memory_space<vmem>>, %arg4: memref<8x768xf32, #tpu.memory_space<vmem>>) attributes {dimension_semantics = [#tpu.dimension_semantics<parallel>], iteration_bounds = array<i64: 2>, scalar_prefetch = 0 : i64, scratch_operands = 0 : i64, tpu.core_type = #tpu.core_type<tc>, window_params = [{transform_indices = @transform_0, window_bounds = array<i64: 8, 768>}, {pipeline_mode = #tpu.pipeline_mode<synchronous>, transform_indices = @transform_1, window_bounds = array<i64: 1, 768>}, {pipeline_mode = #tpu.pipeline_mode<synchronous>, transform_indices = @transform_2, window_bounds = array<i64: 1, 768>}, {transform_indices = @transform_3, window_bounds = array<i64: 8, 768>}]} {
    %c0 = arith.constant 0 : index
    %c0_0 = arith.constant 0 : index
    %0 = vector.load %arg1[%c0, %c0_0] : memref<8x768xf32, #tpu.memory_space<vmem>>, vector<8x768xf32>
    %cst = arith.constant dense<0.000000e+00> : vector<8xf32>
    %1 = vector.multi_reduction <add>, %0, %cst [1] : vector<8x768xf32> to vector<8xf32>
    %2 = vector.shape_cast %1 : vector<8xf32> to vector<8x1xf32>
    %cst_1 = arith.constant 7.680000e+02 : f32
    %3 = vector.broadcast %cst_1 : f32 to vector<8x1xf32>
    %4 = arith.divf %2, %3 : vector<8x1xf32>
    %5 = vector.broadcast %4 : vector<8x1xf32> to vector<8x768xf32>
    %6 = arith.subf %0, %5 : vector<8x768xf32>
    %7 = arith.mulf %6, %6 : vector<8x768xf32>
    %cst_2 = arith.constant dense<0.000000e+00> : vector<8xf32>
    %8 = vector.multi_reduction <add>, %7, %cst_2 [1] : vector<8x768xf32> to vector<8xf32>
    %9 = vector.shape_cast %8 : vector<8xf32> to vector<8x1xf32>
    %cst_3 = arith.constant 7.680000e+02 : f32
    %10 = vector.broadcast %cst_3 : f32 to vector<8x1xf32>
    %11 = arith.divf %9, %10 : vector<8x1xf32>
    %cst_4 = arith.constant 9.99999996E-13 : f32
    %12 = vector.broadcast %cst_4 : f32 to vector<8x1xf32>
    %13 = arith.addf %11, %12 : vector<8x1xf32>
    %14 = math.rsqrt %13 : vector<8x1xf32>
    %15 = vector.broadcast %4 : vector<8x1xf32> to vector<8x768xf32>
    %16 = arith.subf %0, %15 : vector<8x768xf32>
    %17 = vector.broadcast %14 : vector<8x1xf32> to vector<8x768xf32>
    %18 = arith.mulf %16, %17 : vector<8x768xf32>
    %c0_5 = arith.constant 0 : index
    %c0_6 = arith.constant 0 : index
    %19 = vector.load %arg2[%c0_5, %c0_6] : memref<1x768xf32, #tpu.memory_space<vmem>>, vector<1x768xf32>
    %20 = vector.broadcast %19 : vector<1x768xf32> to vector<8x768xf32>
    %21 = arith.mulf %18, %20 : vector<8x768xf32>
    %c0_7 = arith.constant 0 : index
    %c0_8 = arith.constant 0 : index
    %22 = vector.load %arg3[%c0_7, %c0_8] : memref<1x768xf32, #tpu.memory_space<vmem>>, vector<1x768xf32>
    %23 = vector.broadcast %22 : vector<1x768xf32> to vector<8x768xf32>
    %24 = arith.addf %21, %23 : vector<8x768xf32>
    %c0_9 = arith.constant 0 : index
    %c0_10 = arith.constant 0 : index
    %25 = vector.load %arg4[%c0_9, %c0_10] : memref<8x768xf32, #tpu.memory_space<vmem>>, vector<8x768xf32>
    tpu.vector_store %arg4[%c0_9, %c0_10], %24 {strides = array<i32>} : memref<8x768xf32, #tpu.memory_space<vmem>>, vector<8x768xf32>,
    return
  }
  func.func @transform_0(%arg0: i32) -> (i32, i32) {
    %c0_i32 = arith.constant 0 : i32
    %c0_i32_0 = arith.constant 0 : i32
    return %arg0, %c0_i32 : i32, i32
  }
  func.func @transform_1(%arg0: i32) -> (i32, i32) {
    %c0_i32 = arith.constant 0 : i32
    %c0_i32_0 = arith.constant 0 : i32
    %c0_i32_1 = arith.constant 0 : i32
    return %c0_i32, %c0_i32_0 : i32, i32
  }
  func.func @transform_2(%arg0: i32) -> (i32, i32) {
    %c0_i32 = arith.constant 0 : i32
    %c0_i32_0 = arith.constant 0 : i32
    %c0_i32_1 = arith.constant 0 : i32
    return %c0_i32, %c0_i32_0 : i32, i32
  }
  func.func @transform_3(%arg0: i32) -> (i32, i32) {
    %c0_i32 = arith.constant 0 : i32
    %c0_i32_0 = arith.constant 0 : i32
    return %arg0, %c0_i32 : i32, i32
  }
}

</mosaic_0001>

<llo_original>
// kernel: tpu_custom_call.1
$region0: #{tpu_custom_call.1}
  #allocation0 [shape = 'u32[]', space=smem, size = 0x4, offset = 0x4, fixed_abs, tag = 'smem constant byte address 0x4 - core index']
  #allocation1 [shape = 'u32[144,128]{1,0:T(1,128)}', space=vmem, size = 0x12000, scoped, tag = 'internal scratch']
  %s0 = inlined_call_operand.hbm [shape: f32[16,768], index: 0, kind: input, shape index: {}]
  %s1 = inlined_call_operand.hbm [shape: f32[1,768], index: 1, kind: input, shape index: {}]
  %s2 = inlined_call_operand.vmem [shape: f32[1,768], index: 2, kind: input, shape index: {}]
  %s3 = inlined_call_operand.hbm [shape: f32[16,768], index: 3, kind: output, shape index: {}]
  %s4 = sld [smem:[#allocation0]]
  $region53: #{tpu_custom_call.1} parent=0
    _
  %s6 = ssub.s32 1, %s4
  %s7 = scalar_select 0, %s6, %s4
  $region1: #{tpu_custom_call.1} parent=0
    #allocation2 [shape = 'u8[49152]{0}', space=vmem, size = 0xc000, scoped, tag = 'input window, operand 0']
    #allocation3 [shape = 's32[2]{0}', space=sflag, size = 0x8, scoped, tag = 'scoped memory for tpu_custom_call.1']
    #allocation4 [shape = 's32[2]{0}', space=sflag, size = 0x8, scoped, tag = 'scoped memory for tpu_custom_call.1']
    #allocation5 [shape = 'u8[3072]{0}', space=vmem, size = 0xc00, scoped, tag = 'input window, operand 1, single buffered']
    #allocation6 [shape = 's32[1]{0}', space=sflag, size = 0x4, scoped, tag = 'scoped memory for tpu_custom_call.1']
    #allocation7 [shape = 'u8[49152]{0}', space=vmem, size = 0xc000, scoped, tag = 'output window, operand 0']
    %8 = vsyncpa [#allocation3], 0
    %s9 = scalar_lea.sflag [#allocation3], 1
    %10 = vsyncpa %s9, 0
    %11 = vsyncpa [#allocation6], 0
    %12 = vsyncpa [#allocation4], 0
    %s13 = scalar_lea.sflag [#allocation4], 1
    %14 = vsyncpa %s13, 0
    loop: start=0, step=1, limit=4
    $region2: #{tpu_custom_call.1} parent=1 // loop_pre_header
      _
    $region3: #{tpu_custom_call.1} parent=1 // loop_header
      %s16 = sphi 0, %s20
      %p17 = scmp.ge.s32.totalorder %s16, 4
      %s26 = sphi 0, %s28
      %s29 = sphi 0, %s26
      %s30 = sphi 0, %s29
      %s46 = sphi 0, %s30
      %s50 = sphi 0, %s50
      %s52 = sphi 0, %s50
      %s53 = sphi 0, %s52
      %s67 = sphi 0, %s53
      %s71 = sphi 0, %s71
      %s73 = sphi 0, %s71
      %s74 = sphi 0, %s73
      %s88 = sphi 0, %s74
      %s94 = sphi 0, %s96
      %s97 = sphi 0, %s94
      %s98 = sphi 0, %s97
      %s114 = sphi 0, %s98
    $region4: #{tpu_custom_call.1} parent=1 // loop_header_branch
      %19 = sbr.rel (%p17) target = $region8
    $region5: #{tpu_custom_call.1} parent=1 // loop_body
      %s21 = ssub.s32 %s16, 1
      %s22 = ssub.s32 %s16, 2
      %s23 = sadd.s32 %s16, 1
      %s24 = ssub.s32 %s16, %s23
      %p25 = scmp.eq.s32.totalorder %s24, 0
      %s27 = sadd.s32 %s26, 1
      %s28 = scalar_select %p25, %s26, %s27
      %p31 = pneg %p25
      %p32 = scmp.eq.s32.totalorder %s16, 1
      %p33 = por %p31, %p32
      %p34 = scmp.ne.s32.totalorder %s26, %s29
      %p35 = scmp.eq.s32.totalorder %s16, 0
      %p36 = por %p34, %p35
      %p37 = scmp.ne.s32.totalorder %s26, %s29
      %p38 = scmp.eq.s32.totalorder %s21, 1
      %p39 = por %p37, %p38
      %p40 = scmp.ne.s32.totalorder %s29, %s30
      %p41 = scmp.eq.s32.totalorder %s21, 0
      %p42 = por %p40, %p41
      %p43 = scmp.ne.s32.totalorder %s29, %s30
      %p44 = scmp.eq.s32.totalorder %s22, 1
      %p45 = por %p43, %p44
      %p47 = scmp.ne.s32.totalorder %s30, %s46
      %p48 = scmp.eq.s32.totalorder %s22, 0
      %p49 = por %p47, %p48
      %s51 = sadd.s32 %s50, 1
      %p54 = scmp.eq.s32.totalorder %s16, 1
      %p55 = scmp.ne.s32.totalorder %s50, %s52
      %p56 = scmp.eq.s32.totalorder %s16, 0
      %p57 = por %p55, %p56
      %p58 = scmp.ne.s32.totalorder %s50, %s52
      %p59 = scmp.eq.s32.totalorder %s21, 1
      %p60 = por %p58, %p59
      %p61 = scmp.ne.s32.totalorder %s52, %s53
      %p62 = scmp.eq.s32.totalorder %s21, 0
      %p63 = por %p61, %p62
      %p64 = scmp.ne.s32.totalorder %s52, %s53
      %p65 = scmp.eq.s32.totalorder %s22, 1
      %p66 = por %p64, %p65
      %p68 = scmp.ne.s32.totalorder %s53, %s67
      %p69 = scmp.eq.s32.totalorder %s22, 0
      %p70 = por %p68, %p69
      %s72 = sadd.s32 %s71, 1
      %p75 = scmp.eq.s32.totalorder %s16, 1
      %p76 = scmp.ne.s32.totalorder %s71, %s73
      %p77 = scmp.eq.s32.totalorder %s16, 0
      %p78 = por %p76, %p77
      %p79 = scmp.ne.s32.totalorder %s71, %s73
      %p80 = scmp.eq.s32.totalorder %s21, 1
      %p81 = por %p79, %p80
      %p82 = scmp.ne.s32.totalorder %s73, %s74
      %p83 = scmp.eq.s32.totalorder %s21, 0
      %p84 = por %p82, %p83
      %p85 = scmp.ne.s32.totalorder %s73, %s74
      %p86 = scmp.eq.s32.totalorder %s22, 1
      %p87 = por %p85, %p86
      %p89 = scmp.ne.s32.totalorder %s74, %s88
      %p90 = scmp.eq.s32.totalorder %s22, 0
      %p91 = por %p89, %p90
      %s92 = ssub.s32 %s16, %s23
      %p93 = scmp.eq.s32.totalorder %s92, 0
      %s95 = sadd.s32 %s94, 1
      %s96 = scalar_select %p93, %s94, %s95
      %p99 = pneg %p93
      %p100 = scmp.eq.s32.totalorder %s16, 1
      %p101 = por %p99, %p100
      %p102 = scmp.ne.s32.totalorder %s94, %s97
      %p103 = scmp.eq.s32.totalorder %s16, 0
      %p104 = por %p102, %p103
      %p105 = scmp.ne.s32.totalorder %s94, %s97
      %p106 = scmp.eq.s32.totalorder %s21, 1
      %p107 = por %p105, %p106
      %p108 = scmp.ne.s32.totalorder %s97, %s98
      %p109 = scmp.eq.s32.totalorder %s21, 0
      %p110 = por %p108, %p109
      %p111 = scmp.ne.s32.totalorder %s97, %s98
      %p112 = scmp.eq.s32.totalorder %s22, 1
      %p113 = por %p111, %p112
      %p115 = scmp.ne.s32.totalorder %s98, %s114
      %p116 = scmp.eq.s32.totalorder %s22, 0
      %p117 = por %p115, %p116
      %p118 = scmp.le.s32.totalorder 1, %s16
      %p119 = scmp.lt.s32.totalorder %s16, 3
      %p120 = pnand %p118, %p119
      %p121 = pneg %p120
      // Predicated region
      $region9: #{tpu_custom_call.1} parent=5 // pred_check
        _
      $region10: #{tpu_custom_call.1} parent=5 // pred_check_branch
        %123 = sbr.rel (%p120) target = $region12
      $region11: #{tpu_custom_call.1} parent=5 // pred_region
        %s124 = ssub.s32 %s16, 1
        // Predicated region
        $region13: #{tpu_custom_call.1} parent=11 // pred_check
          %p125 = pneg %p63
        $region14: #{tpu_custom_call.1} parent=11 // pred_check_branch
          %127 = sbr.rel (%p125) target = $region16
        $region15: #{tpu_custom_call.1} parent=11 // pred_region
          %s129 = ssub.s32 96, 96
          %130 = vsyncadd [#allocation6], %s129
          %s132 = sshll.u32 [#allocation5], 4
          %s133 = int_to_ptr.vmem [resolvable:$true] %s132
          %135 = dma.hbm_to_vmem [thread:$0]  %s1, 96, %s133, [#allocation6]
        $region16: #{tpu_custom_call.1} parent=11 // pred_fallthru
          _
        // Predicated region
        $region17: #{tpu_custom_call.1} parent=11 // pred_check
          %p136 = pneg %p84
        $region18: #{tpu_custom_call.1} parent=11 // pred_check_branch
          %138 = sbr.rel (%p136) target = $region20
        $region19: #{tpu_custom_call.1} parent=11 // pred_region
          _
        $region20: #{tpu_custom_call.1} parent=11 // pred_fallthru
          _
      $region12: #{tpu_custom_call.1} parent=5 // pred_fallthru
        _
      %p139 = scmp.lt.s32.totalorder %s16, 2
      // Predicated region
      $region21: #{tpu_custom_call.1} parent=5 // pred_check
        %p140 = pneg %p139
      $region22: #{tpu_custom_call.1} parent=5 // pred_check_branch
        %142 = sbr.rel (%p140) target = $region24
      $region23: #{tpu_custom_call.1} parent=5 // pred_region
        // Predicated region
        $region25: #{tpu_custom_call.1} parent=23 // pred_check
          %p143 = pneg %p36
        $region26: #{tpu_custom_call.1} parent=23 // pred_check_branch
          %145 = sbr.rel (%p143) target = $region28
        $region27: #{tpu_custom_call.1} parent=23 // pred_region
          %s146 = sand.u32 %s26, 1
          %s147 = scalar_lea.sflag [#allocation3], %s146
          %s148 = sand.u32 %s26, 1
          %s149 = smul.addr %s148, 48
          %s150 = scalar_lea.vmem [#allocation2], %s149
          %s152 = ssub.s32 768, 768
          %153 = vsyncadd %s147, %s152
          %s154 = smul.addr %s16, 6
          %s155 = smul.addr %s154, 128
          %s156 = scalar_lea.hbm %s0, %s155
          %s158 = sshll.u32 %s150, 4
          %s159 = int_to_ptr.vmem [resolvable:$true] %s158
          %161 = dma.hbm_to_vmem [thread:$0]  %s156, 768, %s159, %s147
        $region28: #{tpu_custom_call.1} parent=23 // pred_fallthru
          _
      $region24: #{tpu_custom_call.1} parent=5 // pred_fallthru
        _
      %p162 = scmp.le.s32.totalorder 1, %s16
      %p163 = scmp.lt.s32.totalorder %s16, 3
      %p164 = pnand %p162, %p163
      %p165 = pneg %p164
      // Predicated region
      $region29: #{tpu_custom_call.1} parent=5 // pred_check
        _
      $region30: #{tpu_custom_call.1} parent=5 // pred_check_branch
        %167 = sbr.rel (%p164) target = $region32
      $region31: #{tpu_custom_call.1} parent=5 // pred_region
        %s168 = ssub.s32 %s16, 1
        %s169 = sand.u32 %s29, 1
        %s170 = scalar_lea.sflag [#allocation3], %s169
        %s171 = sand.u32 %s29, 1
        %s172 = smul.addr %s171, 48
        %s173 = scalar_lea.vmem [#allocation2], %s172
        // Predicated region
        $region33: #{tpu_custom_call.1} parent=31 // pred_check
          %p174 = pneg %p42
        $region34: #{tpu_custom_call.1} parent=31 // pred_check_branch
          %176 = sbr.rel (%p174) target = $region36
        $region35: #{tpu_custom_call.1} parent=31 // pred_region
          %177 = dma.done %s170, 768
        $region36: #{tpu_custom_call.1} parent=31 // pred_fallthru
          _
        // Predicated region
        $region37: #{tpu_custom_call.1} parent=31 // pred_check
          %p178 = pneg %p63
        $region38: #{tpu_custom_call.1} parent=31 // pred_check_branch
          %180 = sbr.rel (%p178) target = $region40
        $region39: #{tpu_custom_call.1} parent=31 // pred_region
          %181 = dma.done [#allocation6], 96
        $region40: #{tpu_custom_call.1} parent=31 // pred_fallthru
          _
        %s182 = sand.u32 %s29, 1
        %s183 = scalar_lea.sflag [#allocation3], %s182
        %s184 = sand.u32 %s29, 1
        %s185 = smul.addr %s184, 48
        %s186 = scalar_lea.vmem [#allocation2], %s185
        %p187 = pneg %p42
        %p188 = pneg %p39
        %p189 = pneg %p63
        %p190 = pneg %p60
        %p191 = pneg %p84
        %p192 = pneg %p81
        %p193 = pneg %p110
        %p194 = pneg %p107
        %s195 = sand.u32 %s97, 1
        %s196 = scalar_lea.sflag [#allocation4], %s195
        %s197 = sand.u32 %s97, 1
        %s198 = smul.addr %s197, 48
        %s199 = scalar_lea.vmem [#allocation7], %s198
        %v200 = vld [vmem:[%s173] sm:$0xff]
        %v201 = vld [vmem:[%s173 + $0x8] sm:$0xff]
        %v202 = vld [vmem:[%s173 + $0x10] sm:$0xff]
        %v203 = vld [vmem:[%s173 + $0x18] sm:$0xff]
        %v204 = vld [vmem:[%s173 + $0x20] sm:$0xff]
        %v205 = vld [vmem:[%s173 + $0x28] sm:$0xff]
        %v206 = vadd.f32 %v200, %v201
        %v207 = vadd.f32 %v206, %v202
        %v208 = vadd.f32 %v207, %v203
        %v209 = vadd.f32 %v208, %v204
        %v210 = vadd.f32 %v209, %v205
        %211 = vadd.xlane.f32.xlu0 %v210
        %v212 = vpop.xlane.xlu0 %211
        %v213 = vrcp.pop 768.0
        %v214 = vmul.f32 %v212, %v213
        %v215 = vsub.f32 %v200, %v214
        %v216 = vsub.f32 %v201, %v214
        %v217 = vsub.f32 %v202, %v214
        %v218 = vsub.f32 %v203, %v214
        %v219 = vsub.f32 %v204, %v214
        %v220 = vsub.f32 %v205, %v214
        %v221 = vmul.f32 %v215, %v215
        %v222 = vmul.f32 %v216, %v216
        %v223 = vmul.f32 %v217, %v217
        %v224 = vmul.f32 %v218, %v218
        %v225 = vmul.f32 %v219, %v219
        %v226 = vmul.f32 %v220, %v220
        %v227 = vadd.f32 %v221, %v222
        %v228 = vadd.f32 %v227, %v223
        %v229 = vadd.f32 %v228, %v224
        %v230 = vadd.f32 %v229, %v225
        %v231 = vadd.f32 %v230, %v226
        %232 = vadd.xlane.f32.xlu0 %v231
        %v233 = vpop.xlane.xlu0 %232
        %v234 = vmul.f32 %v233, %v213
        %v235 = vadd.f32 %v234, 1e-12
        %v236 = vrsqrt.pop %v235
        %v237 = vmul.f32 %v215, %v236
        %v238 = vmul.f32 %v216, %v236
        %v239 = vmul.f32 %v217, %v236
        %v240 = vmul.f32 %v218, %v236
        %v241 = vmul.f32 %v219, %v236
        %v242 = vmul.f32 %v220, %v236
        %v243 = vld [vmem:[#allocation5] sm:$0x3f]
        %v245 = vlaneseq
        %v246 = vshrl.u32 %v245, 7
        %v247 = vsub.s32 0, %v246
        %v248 = vrot.slane %v243, %v247
        %v249 = vlaneseq
        %v250 = vshrl.u32 %v249, 7
        %v251 = vsub.s32 1, %v250
        %v252 = vrot.slane %v243, %v251
        %v253 = vlaneseq
        %v254 = vshrl.u32 %v253, 7
        %v255 = vsub.s32 2, %v254
        %v256 = vrot.slane %v243, %v255
        %v257 = vlaneseq
        %v258 = vshrl.u32 %v257, 7
        %v259 = vsub.s32 3, %v258
        %v260 = vrot.slane %v243, %v259
        %v261 = vlaneseq
        %v262 = vshrl.u32 %v261, 7
        %v263 = vsub.s32 4, %v262
        %v264 = vrot.slane %v243, %v263
        %v265 = vlaneseq
        %v266 = vshrl.u32 %v265, 7
        %v267 = vsub.s32 5, %v266
        %v268 = vrot.slane %v243, %v267
        %v275 = vmul.f32 %v237, %v248
        %v276 = vmul.f32 %v238, %v252
        %v277 = vmul.f32 %v239, %v256
        %v278 = vmul.f32 %v240, %v260
        %v279 = vmul.f32 %v241, %v264
        %v280 = vmul.f32 %v242, %v268
        %v281 = vld [vmem:[%s2] sm:$0x3f]
        %v283 = vlaneseq
        %v284 = vshrl.u32 %v283, 7
        %v285 = vsub.s32 0, %v284
        %v286 = vrot.slane %v281, %v285
        %v287 = vlaneseq
        %v288 = vshrl.u32 %v287, 7
        %v289 = vsub.s32 1, %v288
        %v290 = vrot.slane %v281, %v289
        %v291 = vlaneseq
        %v292 = vshrl.u32 %v291, 7
        %v293 = vsub.s32 2, %v292
        %v294 = vrot.slane %v281, %v293
        %v295 = vlaneseq
        %v296 = vshrl.u32 %v295, 7
        %v297 = vsub.s32 3, %v296
        %v298 = vrot.slane %v281, %v297
        %v299 = vlaneseq
        %v300 = vshrl.u32 %v299, 7
        %v301 = vsub.s32 4, %v300
        %v302 = vrot.slane %v281, %v301
        %v303 = vlaneseq
        %v304 = vshrl.u32 %v303, 7
        %v305 = vsub.s32 5, %v304
        %v306 = vrot.slane %v281, %v305
        %v313 = vadd.f32 %v275, %v286
        %v314 = vadd.f32 %v276, %v290
        %v315 = vadd.f32 %v277, %v294
        %v316 = vadd.f32 %v278, %v298
        %v317 = vadd.f32 %v279, %v302
        %v318 = vadd.f32 %v280, %v306
        %319 = vst [vmem:[%s199] sm:$0xff] %v313
        %320 = vst [vmem:[%s199 + $0x8] sm:$0xff] %v314
        %321 = vst [vmem:[%s199 + $0x10] sm:$0xff] %v315
        %322 = vst [vmem:[%s199 + $0x18] sm:$0xff] %v316
        %323 = vst [vmem:[%s199 + $0x20] sm:$0xff] %v317
        %324 = vst [vmem:[%s199 + $0x28] sm:$0xff] %v318
        %s325 = sand.u32 %s97, 1
        %s326 = scalar_lea.sflag [#allocation4], %s325
        %s327 = sand.u32 %s97, 1
        %s328 = smul.addr %s327, 48
        %s329 = scalar_lea.vmem [#allocation7], %s328
        // Predicated region
        $region41: #{tpu_custom_call.1} parent=31 // pred_check
          %p330 = pneg %p107
        $region42: #{tpu_custom_call.1} parent=31 // pred_check_branch
          %332 = sbr.rel (%p330) target = $region44
        $region43: #{tpu_custom_call.1} parent=31 // pred_region
          %s334 = ssub.s32 768, 768
          %335 = vsyncadd %s326, %s334
          %s336 = smul.addr %s21, 6
          %s337 = smul.addr %s336, 128
          %s338 = scalar_lea.hbm %s3, %s337
          %s340 = sshll.u32 %s329, 4
          %s341 = int_to_ptr.vmem [resolvable:$true] %s340
          %343 = dma.vmem_to_hbm [thread:$0]  %s341, 768, %s338, %s326
        $region44: #{tpu_custom_call.1} parent=31 // pred_fallthru
          _
      $region32: #{tpu_custom_call.1} parent=5 // pred_fallthru
        _
      %p344 = scmp.le.s32.totalorder 2, %s16
      // Predicated region
      $region45: #{tpu_custom_call.1} parent=5 // pred_check
        %p345 = pneg %p344
      $region46: #{tpu_custom_call.1} parent=5 // pred_check_branch
        %347 = sbr.rel (%p345) target = $region48
      $region47: #{tpu_custom_call.1} parent=5 // pred_region
        %s348 = ssub.s32 %s16, 2
        // Predicated region
        $region49: #{tpu_custom_call.1} parent=47 // pred_check
          %p349 = pneg %p113
        $region50: #{tpu_custom_call.1} parent=47 // pred_check_branch
          %351 = sbr.rel (%p349) target = $region52
        $region51: #{tpu_custom_call.1} parent=47 // pred_region
          %s352 = sand.u32 %s98, 1
          %s353 = scalar_lea.sflag [#allocation4], %s352
          %s354 = sand.u32 %s98, 1
          %s355 = smul.addr %s354, 48
          %s356 = scalar_lea.vmem [#allocation7], %s355
          %357 = dma.done %s353, 768
        $region52: #{tpu_custom_call.1} parent=47 // pred_fallthru
          _
      $region48: #{tpu_custom_call.1} parent=5 // pred_fallthru
        _
    $region6: #{tpu_custom_call.1} parent=1 // loop_footer
      %s20 = sadd.s32 1, %s16
    $region7: #{tpu_custom_call.1} parent=1 // loop_footer_branch
      %15 = sbr.rel target = $region3
    $region8: #{tpu_custom_call.1} parent=1 // loop_exit
      _
    %358 = vsyncpa [#allocation3], 1
    %s359 = scalar_lea.sflag [#allocation3], 1
    %360 = vsyncpa %s359, 1
    %361 = vsyncpa [#allocation6], 1
    %362 = vsyncpa [#allocation4], 1
    %s363 = scalar_lea.sflag [#allocation4], 1
    %364 = vsyncpa %s363, 1

</llo_original>
